<compile_context>
chip_gen: v7x
topology: tpu7x:2x2x1
jax: 0.10.0
libtpu: 0.0.40
codegen_flags: <defaults>
</compile_context>

<pallas_src>
import functools

import jax
import jax.numpy as jnp
from jax import lax
from jax.experimental import pallas as pl
from jax.experimental.pallas import tpu as pltpu


def _sepconv_kernel(x_ref, wdw_ref, wpw_ref, o_ref, *, row_stride, n_taps, KW,
                    mxu_dtype):
    # x_ref  : (C, L) with L = Bt * HWp   channels in sublanes, spatial in lanes
    # wdw_ref: (C, n_taps)                depthwise taps
    # wpw_ref: (O, C)                     pointwise 1x1 weights
    # o_ref  : (O, L)                     padded frames; wrapper crops valid region
    x = x_ref[...].astype(jnp.float32)
    wdw = wdw_ref[...].astype(jnp.float32)
    L = x.shape[1]

    # ---- depthwise conv (VALID, stride 1) ----
    # One XLU roll + one VPU MAC per tap over the whole slab.  Two accumulator
    # chains expose a little ILP on the 4 VALUs instead of one serial chain.
    acc0 = x * wdw[:, 0:1]                       # tap (kh=0, kw=0), no shift
    acc1 = None
    for k in range(1, n_taps):
        kh, kw = divmod(k, KW)
        s = kh * row_stride + kw                 # 0 < s < HW <= L
        term = pltpu.roll(x, shift=L - s, axis=1) * wdw[:, k:k + 1]
        if k % 2 == 1:
            acc1 = term if acc1 is None else acc1 + term
        else:
            acc0 = acc0 + term
    acc = acc0 if acc1 is None else acc0 + acc1

    # ---- pointwise 1x1 conv: single MXU matmul per grid step, N = Bt*HWp ----
    out = jnp.dot(wpw_ref[...].astype(mxu_dtype), acc.astype(mxu_dtype),
                  preferred_element_type=jnp.float32)
    o_ref[...] = out.astype(o_ref.dtype)


def _pick_images_per_step(B, C, O, HWp, itemsize, budget_bytes):
    """Largest divisor Bt of B whose per-step VMEM footprint fits the budget."""
    def fits(bt):
        lanes = bt * HWp
        io_bytes = 2 * lanes * (C + O) * itemsize     # double-buffered in/out blocks
        work_bytes = lanes * (4 * C + 2 * O) * 4      # rough f32 temporaries in body
        return io_bytes + work_bytes <= budget_bytes
    best = 1
    for bt in range(1, B + 1):
        if B % bt == 0 and fits(bt):
            best = bt
    return best


def separable_conv2d(x, w_dw, w_pw, *, images_per_step=None,
                     vmem_budget_bytes=16 * 1024 * 1024):
    """x: (B, C, H, W); w_dw: (C, 1, KH, KW); w_pw: (O, C, 1, 1) -> (B, O, Ho, Wo).

    Matches nn.Conv2d(C, C, K, groups=C, bias=False) followed by
    nn.Conv2d(C, O, 1, bias=False) with default stride/padding/dilation.
    """
    B, C, H, W = x.shape
    Cd, one, KH, KW = w_dw.shape
    assert Cd == C and one == 1
    O = w_pw.shape[0]
    assert w_pw.shape[1] == C and w_pw.shape[2:] == (1, 1)
    # The roll-with-wraparound trick requires VALID padding, stride 1, dilation 1.
    assert KH <= H and KW <= W, "kernel larger than input not supported"

    Ho, Wo = H - KH + 1, W - KW + 1
    HW = H * W
    HWp = ((HW + 127) // 128) * 128          # lane-dense stores need a 128-multiple

    Bt = (images_per_step if images_per_step is not None
          else _pick_images_per_step(B, C, O, HWp, x.dtype.itemsize,
                                     vmem_budget_bytes))
    assert B % Bt == 0

    # Wrapper-side layout glue: channels -> sublanes, (batch, padded HW) -> lanes.
    x_t = jnp.transpose(x, (1, 0, 2, 3)).reshape(C, B, HW)
    if HWp != HW:
        x_t = jnp.pad(x_t, ((0, 0), (0, 0), (0, HWp - HW)))
    x_flat = x_t.reshape(C, B * HWp)
    wdw2 = w_dw.reshape(C, KH * KW)
    wpw2 = w_pw.reshape(O, C)

    # bf16 inputs -> single-pass bf16 MXU matmul; f32 inputs keep f32 operands
    # (default precision) for parity with the XLA conv reference.
    mxu_dtype = jnp.bfloat16 if x.dtype == jnp.bfloat16 else jnp.float32

    kernel = functools.partial(_sepconv_kernel, row_stride=W, n_taps=KH * KW,
                               KW=KW, mxu_dtype=mxu_dtype)

    out_flat = pl.pallas_call(
        kernel,
        out_shape=jax.ShapeDtypeStruct((O, B * HWp), x.dtype),
        grid=(B // Bt,),
        in_specs=[
            pl.BlockSpec((C, Bt * HWp), lambda b: (0, b)),     # Bt frames / step
            pl.BlockSpec((C, KH * KW), lambda b: (0, 0)),      # depthwise taps
            pl.BlockSpec((O, C), lambda b: (0, 0)),            # pointwise weights
        ],
        out_specs=pl.BlockSpec((O, Bt * HWp), lambda b: (0, b)),
        compiler_params=pltpu.CompilerParams(
            dimension_semantics=("parallel",),
            vmem_limit_bytes=32 * 1024 * 1024,
        ),
    )(x_flat, wdw2, wpw2)

    # Crop the valid (no-padding) conv region outside the kernel so in-kernel
    # stores stay unmasked and lane-dense.
    out = out_flat.reshape(O, B, HWp)[:, :, :HW].reshape(O, B, H, W)
    return jnp.transpose(out, (1, 0, 2, 3))[:, :, :Ho, :Wo]


def _reference(x, w_dw, w_pw):
    C = x.shape[1]
    dn = ("NCHW", "OIHW", "NCHW")
    dw = lax.conv_general_dilated(x, w_dw, (1, 1), "VALID",
                                  feature_group_count=C, dimension_numbers=dn)
    pw = lax.conv_general_dilated(dw, w_pw, (1, 1), "VALID", dimension_numbers=dn)
    return pw


if __name__ == "__main__":
    B, C, O, H, W, K = 2, 4, 8, 16, 16, 3

    key = jax.random.PRNGKey(0)
    kx, kd, kp = jax.random.split(key, 3)
    x = jax.random.normal(kx, (B, C, H, W), dtype=jnp.float32)
    # parameter shapes match nn.Conv2d(C, C, K, groups=C, bias=False) and the 1x1 conv
    w_dw = jax.random.normal(kd, (C, 1, K, K), dtype=jnp.float32) * 0.1
    w_pw = jax.random.normal(kp, (O, C, 1, 1), dtype=jnp.float32) * 0.1

    out = separable_conv2d(x, w_dw, w_pw)
    out = jax.block_until_ready(out)

    ref = _reference(x, w_dw, w_pw)
    assert out.shape == ref.shape == (B, O, H - K + 1, W - K + 1)
    assert jnp.allclose(out, ref, atol=1e-4, rtol=1e-4), "mismatch vs. XLA conv reference"

    print("KERNEL_OK")
</pallas_src>

<mosaic_0001>
module attributes {stable_mosaic.version = 11 : i64} {
  func.func @_sepconv_kernel(%arg0: i32, %arg1: memref<4x512xf32, #tpu.memory_space<vmem>>, %arg2: memref<4x9xf32, #tpu.memory_space<vmem>>, %arg3: memref<8x4xf32, #tpu.memory_space<vmem>>, %arg4: memref<8x512xf32, #tpu.memory_space<vmem>>) attributes {dimension_semantics = [#tpu.dimension_semantics<parallel>], iteration_bounds = array<i64: 1>, scalar_prefetch = 0 : i64, scratch_operands = 0 : i64, tpu.core_type = #tpu.core_type<tc>, window_params = [{transform_indices = @transform_0, window_bounds = array<i64: 4, 512>}, {pipeline_mode = #tpu.pipeline_mode<synchronous>, transform_indices = @transform_1, window_bounds = array<i64: 4, 9>}, {pipeline_mode = #tpu.pipeline_mode<synchronous>, transform_indices = @transform_2, window_bounds = array<i64: 8, 4>}, {transform_indices = @transform_3, window_bounds = array<i64: 8, 512>}]} {
    %c0 = arith.constant 0 : index
    %c0_0 = arith.constant 0 : index
    %0 = vector.load %arg1[%c0, %c0_0] : memref<4x512xf32, #tpu.memory_space<vmem>>, vector<4x512xf32>
    %c0_1 = arith.constant 0 : index
    %c0_2 = arith.constant 0 : index
    %1 = vector.load %arg2[%c0_1, %c0_2] : memref<4x9xf32, #tpu.memory_space<vmem>>, vector<4x9xf32>
    %2 = vector.extract_strided_slice %1 {offsets = [0, 0], sizes = [4, 1], strides = [1, 1]} : vector<4x9xf32> to vector<4x1xf32>
    %3 = vector.broadcast %2 : vector<4x1xf32> to vector<4x512xf32>
    %4 = arith.mulf %0, %3 : vector<4x512xf32>
    %c511_i32 = arith.constant 511 : i32
    %5 = tpu.dynamic_rotate %0 by %c511_i32 dim 1 : vector<4x512xf32>, i32 -> vector<4x512xf32>
    %6 = vector.extract_strided_slice %1 {offsets = [0, 1], sizes = [4, 1], strides = [1, 1]} : vector<4x9xf32> to vector<4x1xf32>
    %7 = vector.broadcast %6 : vector<4x1xf32> to vector<4x512xf32>
    %8 = arith.mulf %5, %7 : vector<4x512xf32>
    %c510_i32 = arith.constant 510 : i32
    %9 = tpu.dynamic_rotate %0 by %c510_i32 dim 1 : vector<4x512xf32>, i32 -> vector<4x512xf32>
    %10 = vector.extract_strided_slice %1 {offsets = [0, 2], sizes = [4, 1], strides = [1, 1]} : vector<4x9xf32> to vector<4x1xf32>
    %11 = vector.broadcast %10 : vector<4x1xf32> to vector<4x512xf32>
    %12 = arith.mulf %9, %11 : vector<4x512xf32>
    %13 = arith.addf %4, %12 : vector<4x512xf32>
    %c496_i32 = arith.constant 496 : i32
    %14 = tpu.dynamic_rotate %0 by %c496_i32 dim 1 : vector<4x512xf32>, i32 -> vector<4x512xf32>
    %15 = vector.extract_strided_slice %1 {offsets = [0, 3], sizes = [4, 1], strides = [1, 1]} : vector<4x9xf32> to vector<4x1xf32>
    %16 = vector.broadcast %15 : vector<4x1xf32> to vector<4x512xf32>
    %17 = arith.mulf %14, %16 : vector<4x512xf32>
    %18 = arith.addf %8, %17 : vector<4x512xf32>
    %c495_i32 = arith.constant 495 : i32
    %19 = tpu.dynamic_rotate %0 by %c495_i32 dim 1 : vector<4x512xf32>, i32 -> vector<4x512xf32>
    %20 = vector.extract_strided_slice %1 {offsets = [0, 4], sizes = [4, 1], strides = [1, 1]} : vector<4x9xf32> to vector<4x1xf32>
    %21 = vector.broadcast %20 : vector<4x1xf32> to vector<4x512xf32>
    %22 = arith.mulf %19, %21 : vector<4x512xf32>
    %23 = arith.addf %13, %22 : vector<4x512xf32>
    %c494_i32 = arith.constant 494 : i32
    %24 = tpu.dynamic_rotate %0 by %c494_i32 dim 1 : vector<4x512xf32>, i32 -> vector<4x512xf32>
    %25 = vector.extract_strided_slice %1 {offsets = [0, 5], sizes = [4, 1], strides = [1, 1]} : vector<4x9xf32> to vector<4x1xf32>
    %26 = vector.broadcast %25 : vector<4x1xf32> to vector<4x512xf32>
    %27 = arith.mulf %24, %26 : vector<4x512xf32>
    %28 = arith.addf %18, %27 : vector<4x512xf32>
    %c480_i32 = arith.constant 480 : i32
    %29 = tpu.dynamic_rotate %0 by %c480_i32 dim 1 : vector<4x512xf32>, i32 -> vector<4x512xf32>
    %30 = vector.extract_strided_slice %1 {offsets = [0, 6], sizes = [4, 1], strides = [1, 1]} : vector<4x9xf32> to vector<4x1xf32>
    %31 = vector.broadcast %30 : vector<4x1xf32> to vector<4x512xf32>
    %32 = arith.mulf %29, %31 : vector<4x512xf32>
    %33 = arith.addf %23, %32 : vector<4x512xf32>
    %c479_i32 = arith.constant 479 : i32
    %34 = tpu.dynamic_rotate %0 by %c479_i32 dim 1 : vector<4x512xf32>, i32 -> vector<4x512xf32>
    %35 = vector.extract_strided_slice %1 {offsets = [0, 7], sizes = [4, 1], strides = [1, 1]} : vector<4x9xf32> to vector<4x1xf32>
    %36 = vector.broadcast %35 : vector<4x1xf32> to vector<4x512xf32>
    %37 = arith.mulf %34, %36 : vector<4x512xf32>
    %38 = arith.addf %28, %37 : vector<4x512xf32>
    %c478_i32 = arith.constant 478 : i32
    %39 = tpu.dynamic_rotate %0 by %c478_i32 dim 1 : vector<4x512xf32>, i32 -> vector<4x512xf32>
    %40 = vector.extract_strided_slice %1 {offsets = [0, 8], sizes = [4, 1], strides = [1, 1]} : vector<4x9xf32> to vector<4x1xf32>
    %41 = vector.broadcast %40 : vector<4x1xf32> to vector<4x512xf32>
    %42 = arith.mulf %39, %41 : vector<4x512xf32>
    %43 = arith.addf %33, %42 : vector<4x512xf32>
    %44 = arith.addf %43, %38 : vector<4x512xf32>
    %c0_3 = arith.constant 0 : index
    %c0_4 = arith.constant 0 : index
    %45 = vector.load %arg3[%c0_3, %c0_4] : memref<8x4xf32, #tpu.memory_space<vmem>>, vector<8x4xf32>
    %cst = arith.constant dense<0.000000e+00> : vector<8x512xf32>
    %46 = tpu.matmul %45, %44, %cst {dimension_numbers = #tpu.dot_dimension_numbers<[1], [0], [0], [1], [0, 0, 1, 1], [], []>} : vector<8x4xf32>, vector<4x512xf32>, vector<8x512xf32> -> vector<8x512xf32>
    %c0_5 = arith.constant 0 : index
    %c0_6 = arith.constant 0 : index
    %47 = vector.load %arg4[%c0_5, %c0_6] : memref<8x512xf32, #tpu.memory_space<vmem>>, vector<8x512xf32>
    tpu.vector_store %arg4[%c0_5, %c0_6], %46 {strides = array<i32>} : memref<8x512xf32, #tpu.memory_space<vmem>>, vector<8x512xf32>,
    return
  }
  func.func @transform_0(%arg0: i32) -> (i32, i32) {
    %c0_i32 = arith.constant 0 : i32
    %c0_i32_0 = arith.constant 0 : i32
    return %c0_i32, %arg0 : i32, i32
  }
  func.func @transform_1(%arg0: i32) -> (i32, i32) {
    %c0_i32 = arith.constant 0 : i32
    %c0_i32_0 = arith.constant 0 : i32
    %c0_i32_1 = arith.constant 0 : i32
    return %c0_i32, %c0_i32_0 : i32, i32
  }
  func.func @transform_2(%arg0: i32) -> (i32, i32) {
    %c0_i32 = arith.constant 0 : i32
    %c0_i32_0 = arith.constant 0 : i32
    %c0_i32_1 = arith.constant 0 : i32
    return %c0_i32, %c0_i32_0 : i32, i32
  }
  func.func @transform_3(%arg0: i32) -> (i32, i32) {
    %c0_i32 = arith.constant 0 : i32
    %c0_i32_0 = arith.constant 0 : i32
    return %c0_i32, %arg0 : i32, i32
  }
}

</mosaic_0001>

<llo_original>
// kernel: tpu_custom_call.1
$region0: #{tpu_custom_call.1}
  #allocation0 [shape = 'u32[]', space=smem, size = 0x4, offset = 0x4, fixed_abs, tag = 'smem constant byte address 0x4 - core index']
  #allocation1 [shape = 'u32[144,128]{1,0:T(1,128)}', space=vmem, size = 0x12000, scoped, tag = 'internal scratch']
  %s0 = inlined_call_operand.hbm [shape: f32[4,512], index: 0, kind: input, shape index: {}]
  %s1 = inlined_call_operand.vmem [shape: f32[4,9], index: 1, kind: input, shape index: {}]
  %s2 = inlined_call_operand.vmem [shape: f32[8,4], index: 2, kind: input, shape index: {}]
  %s3 = inlined_call_operand.hbm [shape: f32[8,512], index: 3, kind: output, shape index: {}]
  %s4 = sld [smem:[#allocation0]]
  $region26: #{tpu_custom_call.1} parent=0
    _
  %s6 = ssub.s32 1, %s4
  %s7 = scalar_select 0, %s6, %s4
  $region1: #{tpu_custom_call.1} parent=0
    #allocation2 [shape = 'u8[8192]{0}', space=vmem, size = 0x2000, scoped, tag = 'input window, operand 0, single buffered']
    #allocation3 [shape = 's32[1]{0}', space=sflag, size = 0x4, scoped, tag = 'scoped memory for tpu_custom_call.1']
    #allocation4 [shape = 's32[1]{0}', space=sflag, size = 0x4, scoped, tag = 'scoped memory for tpu_custom_call.1']
    #allocation5 [shape = 'u8[16384]{0}', space=vmem, size = 0x4000, scoped, tag = 'output window, operand 0, single buffered']
    %8 = vsyncpa [#allocation3], 0
    %9 = vsyncpa [#allocation4], 0
    // Predicated region
    $region2: #{tpu_custom_call.1} parent=1 // pred_check
      _
    $region3: #{tpu_custom_call.1} parent=1 // pred_check_branch
      %11 = sbr.rel (0) target = $region5
    $region4: #{tpu_custom_call.1} parent=1 // pred_region
      %s13 = ssub.s32 256, 256
      %14 = vsyncadd [#allocation3], %s13
      %s16 = sshll.u32 [#allocation2], 4
      %s17 = int_to_ptr.vmem [resolvable:$true] %s16
      %19 = dma.hbm_to_vmem [thread:$0]  %s0, 256, %s17, [#allocation3]
    $region5: #{tpu_custom_call.1} parent=1 // pred_fallthru
      _
    // Predicated region
    $region6: #{tpu_custom_call.1} parent=1 // pred_check
      _
    $region7: #{tpu_custom_call.1} parent=1 // pred_check_branch
      %21 = sbr.rel (0) target = $region9
    $region8: #{tpu_custom_call.1} parent=1 // pred_region
      _
    $region9: #{tpu_custom_call.1} parent=1 // pred_fallthru
      _
    // Predicated region
    $region10: #{tpu_custom_call.1} parent=1 // pred_check
      _
    $region11: #{tpu_custom_call.1} parent=1 // pred_check_branch
      %23 = sbr.rel (0) target = $region13
    $region12: #{tpu_custom_call.1} parent=1 // pred_region
      _
    $region13: #{tpu_custom_call.1} parent=1 // pred_fallthru
      _
    // Predicated region
    $region14: #{tpu_custom_call.1} parent=1 // pred_check
      _
    $region15: #{tpu_custom_call.1} parent=1 // pred_check_branch
      %25 = sbr.rel (0) target = $region17
    $region16: #{tpu_custom_call.1} parent=1 // pred_region
      %26 = dma.done [#allocation3], 256
    $region17: #{tpu_custom_call.1} parent=1 // pred_fallthru
      _
    %v27 = vld [vmem:[#allocation2] sm:$0xff]
    %v28 = vld [vmem:[#allocation2 + $0x8] sm:$0xff]
    %v29 = vld [vmem:[%s1] sm:$0xf]
    %31 = vset.pattern.permute.xlu0 0
    %32 = vperm.xlu0 %31, %v29
    %v33 = vpop.permute.xlu0 %32
    %v35 = vunpack.c.l.s4 839922192
    %v36 = vunpack.c.0.s8 %v35
    %v37 = vlaneseq
    %v38 = vshrl.u32 %v37, 7
    %v39 = vsub.s32 %v36, %v38
    %v40 = vrot.slane %v33, %v39
    %v42 = vmul.f32 %v27, %v40
    %v43 = vmul.f32 %v28, %v40
    %v46 = vcombine.high %v27, %v27
    %v47 = vcombine.high %v28, %v28
    %50 = vrot.lane.b32.xlu0 %v27, 127
    %v51 = vpop.permute.xlu0 %50
    %52 = vrot.lane.b32.xlu0 %v46, 127
    %v53 = vpop.permute.xlu0 %52
    %54 = vrot.lane.b32.xlu0 %v28, 127
    %v55 = vpop.permute.xlu0 %54
    %56 = vrot.lane.b32.xlu0 %v47, 127
    %v57 = vpop.permute.xlu0 %56
    %v58 = vlaneseq
    %v59 = vand.u32 %v58, 127
    %vm60 = vcmp.lt.s32.totalorder %v59, 127
    %v61 = vsel %vm60, %v55, %v57
    %v62 = vsel %vm60, %v53, %v55
    %v63 = vsel %vm60, %v51, %v53
    %v64 = vsel %vm60, %v57, %v51
    %65 = vset.pattern.permute.xlu0 1
    %66 = vperm.xlu0 %65, %v29
    %v67 = vpop.permute.xlu0 %66
    %v69 = vmul.f32 %v63, %v67
    %v70 = vmul.f32 %v62, %v67
    %v71 = vmul.f32 %v61, %v67
    %v72 = vmul.f32 %v64, %v67
    %73 = vrot.lane.b32.xlu0 %v27, 126
    %v74 = vpop.permute.xlu0 %73
    %75 = vrot.lane.b32.xlu0 %v46, 126
    %v76 = vpop.permute.xlu0 %75
    %77 = vrot.lane.b32.xlu0 %v28, 126
    %v78 = vpop.permute.xlu0 %77
    %79 = vrot.lane.b32.xlu0 %v47, 126
    %v80 = vpop.permute.xlu0 %79
    %vm81 = vcmp.lt.s32.totalorder %v59, 126
    %v82 = vsel %vm81, %v78, %v80
    %v83 = vsel %vm81, %v76, %v78
    %v84 = vsel %vm81, %v74, %v76
    %v85 = vsel %vm81, %v80, %v74
    %86 = vset.pattern.permute.xlu0 2
    %87 = vperm.xlu0 %86, %v29
    %v88 = vpop.permute.xlu0 %87
    %v90 = vmul.f32 %v84, %v88
    %v91 = vmul.f32 %v83, %v88
    %v92 = vmul.f32 %v82, %v88
    %v93 = vmul.f32 %v85, %v88
    %v98 = vcombine.low %v90, %v91
    %v99 = vcombine.low %v92, %v93
    %v102 = vadd.f32 %v42, %v98
    %v103 = vadd.f32 %v43, %v99
    %104 = vrot.lane.b32.xlu0 %v27, 112
    %v105 = vpop.permute.xlu0 %104
    %106 = vrot.lane.b32.xlu0 %v46, 112
    %v107 = vpop.permute.xlu0 %106
    %108 = vrot.lane.b32.xlu0 %v28, 112
    %v109 = vpop.permute.xlu0 %108
    %110 = vrot.lane.b32.xlu0 %v47, 112
    %v111 = vpop.permute.xlu0 %110
    %vm112 = vcmp.lt.s32.totalorder %v59, 112
    %v113 = vsel %vm112, %v109, %v111
    %v114 = vsel %vm112, %v107, %v109
    %v115 = vsel %vm112, %v105, %v107
    %v116 = vsel %vm112, %v111, %v105
    %117 = vset.pattern.permute.xlu0 3
    %118 = vperm.xlu0 %117, %v29
    %v119 = vpop.permute.xlu0 %118
    %v121 = vmul.f32 %v115, %v119
    %v122 = vmul.f32 %v114, %v119
    %v123 = vmul.f32 %v113, %v119
    %v124 = vmul.f32 %v116, %v119
    %v125 = vadd.f32 %v69, %v121
    %v126 = vadd.f32 %v70, %v122
    %v127 = vadd.f32 %v71, %v123
    %v128 = vadd.f32 %v72, %v124
    %129 = vrot.lane.b32.xlu0 %v27, 111
    %v130 = vpop.permute.xlu0 %129
    %131 = vrot.lane.b32.xlu0 %v46, 111
    %v132 = vpop.permute.xlu0 %131
    %133 = vrot.lane.b32.xlu0 %v28, 111
    %v134 = vpop.permute.xlu0 %133
    %135 = vrot.lane.b32.xlu0 %v47, 111
    %v136 = vpop.permute.xlu0 %135
    %vm137 = vcmp.lt.s32.totalorder %v59, 111
    %v138 = vsel %vm137, %v134, %v136
    %v139 = vsel %vm137, %v132, %v134
    %v140 = vsel %vm137, %v130, %v132
    %v141 = vsel %vm137, %v136, %v130
    %142 = vset.pattern.permute.xlu0 4
    %143 = vperm.xlu0 %142, %v29
    %v144 = vpop.permute.xlu0 %143
    %v146 = vmul.f32 %v140, %v144
    %v147 = vmul.f32 %v139, %v144
    %v148 = vmul.f32 %v138, %v144
    %v149 = vmul.f32 %v141, %v144
    %v154 = vcombine.low %v146, %v147
    %v155 = vcombine.low %v148, %v149
    %v158 = vadd.f32 %v102, %v154
    %v159 = vadd.f32 %v103, %v155
    %160 = vrot.lane.b32.xlu0 %v27, 110
    %v161 = vpop.permute.xlu0 %160
    %162 = vrot.lane.b32.xlu0 %v46, 110
    %v163 = vpop.permute.xlu0 %162
    %164 = vrot.lane.b32.xlu0 %v28, 110
    %v165 = vpop.permute.xlu0 %164
    %166 = vrot.lane.b32.xlu0 %v47, 110
    %v167 = vpop.permute.xlu0 %166
    %vm168 = vcmp.lt.s32.totalorder %v59, 110
    %v169 = vsel %vm168, %v165, %v167
    %v170 = vsel %vm168, %v163, %v165
    %v171 = vsel %vm168, %v161, %v163
    %v172 = vsel %vm168, %v167, %v161
    %173 = vset.pattern.permute.xlu0 5
    %174 = vperm.xlu0 %173, %v29
    %v175 = vpop.permute.xlu0 %174
    %v177 = vmul.f32 %v171, %v175
    %v178 = vmul.f32 %v170, %v175
    %v179 = vmul.f32 %v169, %v175
    %v180 = vmul.f32 %v172, %v175
    %v181 = vadd.f32 %v125, %v177
    %v182 = vadd.f32 %v126, %v178
    %v183 = vadd.f32 %v127, %v179
    %v184 = vadd.f32 %v128, %v180
    %185 = vrot.lane.b32.xlu0 %v27, 96
    %v186 = vpop.permute.xlu0 %185
    %187 = vrot.lane.b32.xlu0 %v46, 96
    %v188 = vpop.permute.xlu0 %187
    %189 = vrot.lane.b32.xlu0 %v28, 96
    %v190 = vpop.permute.xlu0 %189
    %191 = vrot.lane.b32.xlu0 %v47, 96
    %v192 = vpop.permute.xlu0 %191
    %vm193 = vcmp.lt.s32.totalorder %v59, 96
    %v194 = vsel %vm193, %v190, %v192
    %v195 = vsel %vm193, %v188, %v190
    %v196 = vsel %vm193, %v186, %v188
    %v197 = vsel %vm193, %v192, %v186
    %198 = vset.pattern.permute.xlu0 6
    %199 = vperm.xlu0 %198, %v29
    %v200 = vpop.permute.xlu0 %199
    %v202 = vmul.f32 %v196, %v200
    %v203 = vmul.f32 %v195, %v200
    %v204 = vmul.f32 %v194, %v200
    %v205 = vmul.f32 %v197, %v200
    %v210 = vcombine.low %v202, %v203
    %v211 = vcombine.low %v204, %v205
    %v214 = vadd.f32 %v158, %v210
    %v215 = vadd.f32 %v159, %v211
    %216 = vrot.lane.b32.xlu0 %v27, 95
    %v217 = vpop.permute.xlu0 %216
    %218 = vrot.lane.b32.xlu0 %v46, 95
    %v219 = vpop.permute.xlu0 %218
    %220 = vrot.lane.b32.xlu0 %v28, 95
    %v221 = vpop.permute.xlu0 %220
    %222 = vrot.lane.b32.xlu0 %v47, 95
    %v223 = vpop.permute.xlu0 %222
    %vm224 = vcmp.lt.s32.totalorder %v59, 95
    %v225 = vsel %vm224, %v221, %v223
    %v226 = vsel %vm224, %v219, %v221
    %v227 = vsel %vm224, %v217, %v219
    %v228 = vsel %vm224, %v223, %v217
    %229 = vset.pattern.permute.xlu0 7
    %230 = vperm.xlu0 %229, %v29
    %v231 = vpop.permute.xlu0 %230
    %v233 = vmul.f32 %v227, %v231
    %v234 = vmul.f32 %v226, %v231
    %v235 = vmul.f32 %v225, %v231
    %v236 = vmul.f32 %v228, %v231
    %v237 = vadd.f32 %v181, %v233
    %v238 = vadd.f32 %v182, %v234
    %v239 = vadd.f32 %v183, %v235
    %v240 = vadd.f32 %v184, %v236
    %241 = vrot.lane.b32.xlu0 %v27, 94
    %v242 = vpop.permute.xlu0 %241
    %243 = vrot.lane.b32.xlu0 %v46, 94
    %v244 = vpop.permute.xlu0 %243
    %245 = vrot.lane.b32.xlu0 %v28, 94
    %v246 = vpop.permute.xlu0 %245
    %247 = vrot.lane.b32.xlu0 %v47, 94
    %v248 = vpop.permute.xlu0 %247
    %vm249 = vcmp.lt.s32.totalorder %v59, 94
    %v250 = vsel %vm249, %v246, %v248
    %v251 = vsel %vm249, %v244, %v246
    %v252 = vsel %vm249, %v242, %v244
    %v253 = vsel %vm249, %v248, %v242
    %254 = vset.pattern.permute.xlu0 8
    %255 = vperm.xlu0 %254, %v29
    %v256 = vpop.permute.xlu0 %255
    %v258 = vmul.f32 %v252, %v256
    %v259 = vmul.f32 %v251, %v256
    %v260 = vmul.f32 %v250, %v256
    %v261 = vmul.f32 %v253, %v256
    %v266 = vcombine.low %v258, %v259
    %v267 = vcombine.low %v260, %v261
    %v270 = vadd.f32 %v214, %v266
    %v271 = vadd.f32 %v215, %v267
    %v276 = vcombine.low %v237, %v238
    %v277 = vcombine.low %v239, %v240
    %v280 = vadd.f32 %v270, %v276
    %v281 = vadd.f32 %v271, %v277
    %v282 = vld [vmem:[%s2] sm:$0xff]
    %v285 = vcombine.high %v280, %v280
    %v286 = vcombine.high %v281, %v281
    %vm287 = vcmask 31744
    %v289 = vsel %vm287, %v282, 0
    %vm291 = vcmask 1043456
    %v292 = vsel %vm291, %v280, 0
    %v294 = vsel %vm291, %v285, 0
    %v296 = vsel %vm291, %v281, 0
    %v298 = vsel %vm291, %v286, 0
    %300 = vmatprep.subr.mxu0 %v294
    %301 = vmatpush1.msra.mxu0 %v292
    %302 = vmatprep.subr.mxu0 0.0
    %303 = vmatpush1.msra.mxu0 0.0
    %304 = vmatprep.subr.mxu0 0.0
    %305 = vmatpush1.msra.mxu0 0.0
    %306 = vmatprep.subr.mxu0 0.0
    %307 = vmatpush1.msra.mxu0 0.0
    %308 = vmatprep.subr.mxu0 0.0
    %309 = vmatpush1.msra.mxu0 0.0
    %310 = vmatprep.subr.mxu0 0.0
    %311 = vmatpush1.msra.mxu0 0.0
    %312 = vmatprep.subr.mxu0 0.0
    %313 = vmatpush1.msra.mxu0 0.0
    %314 = vmatprep.subr.mxu0 0.0
    %315 = vmatpush1.msra.mxu0 0.0
    %316 = vmatprep.subr.mxu0 0.0
    %317 = vmatpush1.msra.mxu0 0.0
    %318 = vmatprep.subr.mxu0 0.0
    %319 = vmatpush1.msra.mxu0 0.0
    %320 = vmatprep.subr.mxu0 0.0
    %321 = vmatpush1.msra.mxu0 0.0
    %322 = vmatprep.subr.mxu0 0.0
    %323 = vmatpush1.msra.mxu0 0.0
    %324 = vmatprep.subr.mxu0 0.0
    %325 = vmatpush1.msra.mxu0 0.0
    %326 = vmatprep.subr.mxu0 0.0
    %327 = vmatpush1.msra.mxu0 0.0
    %328 = vmatprep.subr.mxu0 0.0
    %329 = vmatpush1.msra.mxu0 0.0
    %330 = vmatprep.subr.mxu0 0.0
    %331 = vmatpush1.msra.mxu0 0.0
    %332 = vmatprep.subr.mxu0 0.0
    %333 = vmatpush1.msra.mxu0 0.0
    %334 = vmatprep.subr.mxu0 0.0
    %335 = vmatpush1.msra.mxu0 0.0
    %336 = vmatprep.subr.mxu0 0.0
    %337 = vmatpush1.msra.mxu0 0.0
    %338 = vmatprep.subr.mxu0 0.0
    %339 = vmatpush1.msra.mxu0 0.0
    %340 = vmatprep.subr.mxu0 0.0
    %341 = vmatpush1.msra.mxu0 0.0
    %342 = vmatprep.subr.mxu0 0.0
    %343 = vmatpush1.msra.mxu0 0.0
    %344 = vmatprep.subr.mxu0 0.0
    %345 = vmatpush1.msra.mxu0 0.0
    %346 = vmatprep.subr.mxu0 0.0
    %347 = vmatpush1.msra.mxu0 0.0
    %348 = vmatprep.subr.mxu0 0.0
    %349 = vmatpush1.msra.mxu0 0.0
    %350 = vmatprep.subr.mxu0 0.0
    %351 = vmatpush1.msra.mxu0 0.0
    %352 = vmatprep.subr.mxu0 0.0
    %353 = vmatpush1.msra.mxu0 0.0
    %354 = vmatprep.subr.mxu0 0.0
    %355 = vmatpush1.msra.mxu0 0.0
    %356 = vmatprep.subr.mxu0 0.0
    %357 = vmatpush1.msra.mxu0 0.0
    %358 = vmatprep.subr.mxu0 0.0
    %359 = vmatpush1.msra.mxu0 0.0
    %360 = vmatprep.subr.mxu0 0.0
    %361 = vmatpush1.msra.mxu0 0.0
    %362 = vmatprep.subr.mxu0 0.0
    %363 = vmatpush1.msra.mxu0 0.0
    %364 = vmatprep.mubr.f32.mxu0 0.0
    %365 = vmatmul.mubr.f32.gmra.mrb[0].mxu0 %v289
    %v366 = vpop.f32.mrb[0].mxu0
    %v367 = vadd.f32 0.0, %v366
    %v368 = vpop.f32.mrb[0].mxu0
    %v369 = vadd.f32 0.0, %v368
    %370 = vdwg.mxu0
    %371 = vmatprep.subr.mxu0 %v298
    %372 = vmatpush1.msra.mxu0 %v296
    %373 = vmatprep.subr.mxu0 0.0
    %374 = vmatpush1.msra.mxu0 0.0
    %375 = vmatprep.subr.mxu0 0.0
    %376 = vmatpush1.msra.mxu0 0.0
    %377 = vmatprep.subr.mxu0 0.0
    %378 = vmatpush1.msra.mxu0 0.0
    %379 = vmatprep.subr.mxu0 0.0
    %380 = vmatpush1.msra.mxu0 0.0
    %381 = vmatprep.subr.mxu0 0.0
    %382 = vmatpush1.msra.mxu0 0.0
    %383 = vmatprep.subr.mxu0 0.0
    %384 = vmatpush1.msra.mxu0 0.0
    %385 = vmatprep.subr.mxu0 0.0
    %386 = vmatpush1.msra.mxu0 0.0
    %387 = vmatprep.subr.mxu0 0.0
    %388 = vmatpush1.msra.mxu0 0.0
    %389 = vmatprep.subr.mxu0 0.0
    %390 = vmatpush1.msra.mxu0 0.0
    %391 = vmatprep.subr.mxu0 0.0
    %392 = vmatpush1.msra.mxu0 0.0
    %393 = vmatprep.subr.mxu0 0.0
    %394 = vmatpush1.msra.mxu0 0.0
    %395 = vmatprep.subr.mxu0 0.0
    %396 = vmatpush1.msra.mxu0 0.0
    %397 = vmatprep.subr.mxu0 0.0
    %398 = vmatpush1.msra.mxu0 0.0
    %399 = vmatprep.subr.mxu0 0.0
    %400 = vmatpush1.msra.mxu0 0.0
    %401 = vmatprep.subr.mxu0 0.0
    %402 = vmatpush1.msra.mxu0 0.0
    %403 = vmatprep.subr.mxu0 0.0
    %404 = vmatpush1.msra.mxu0 0.0
    %405 = vmatprep.subr.mxu0 0.0
    %406 = vmatpush1.msra.mxu0 0.0
    %407 = vmatprep.subr.mxu0 0.0
    %408 = vmatpush1.msra.mxu0 0.0
    %409 = vmatprep.subr.mxu0 0.0
    %410 = vmatpush1.msra.mxu0 0.0
    %411 = vmatprep.subr.mxu0 0.0
    %412 = vmatpush1.msra.mxu0 0.0
    %413 = vmatprep.subr.mxu0 0.0
    %414 = vmatpush1.msra.mxu0 0.0
    %415 = vmatprep.subr.mxu0 0.0
    %416 = vmatpush1.msra.mxu0 0.0
    %417 = vmatprep.subr.mxu0 0.0
    %418 = vmatpush1.msra.mxu0 0.0
    %419 = vmatprep.subr.mxu0 0.0
    %420 = vmatpush1.msra.mxu0 0.0
    %421 = vmatprep.subr.mxu0 0.0
    %422 = vmatpush1.msra.mxu0 0.0
    %423 = vmatprep.subr.mxu0 0.0
    %424 = vmatpush1.msra.mxu0 0.0
    %425 = vmatprep.subr.mxu0 0.0
    %426 = vmatpush1.msra.mxu0 0.0
    %427 = vmatprep.subr.mxu0 0.0
    %428 = vmatpush1.msra.mxu0 0.0
    %429 = vmatprep.subr.mxu0 0.0
    %430 = vmatpush1.msra.mxu0 0.0
    %431 = vmatprep.subr.mxu0 0.0
    %432 = vmatpush1.msra.mxu0 0.0
    %433 = vmatprep.subr.mxu0 0.0
    %434 = vmatpush1.msra.mxu0 0.0
    %435 = vmatprep.mubr.f32.mxu0 0.0
    %436 = vmatmul.mubr.f32.gmra.mrb[0].mxu0 %v289
    %v437 = vpop.f32.mrb[0].mxu0
    %v438 = vadd.f32 0.0, %v437
    %v439 = vpop.f32.mrb[0].mxu0
    %v440 = vadd.f32 0.0, %v439
    %441 = vdwg.mxu0
    %442 = vst [vmem:[#allocation5] sm:$0xff] %v367
    %443 = vst [vmem:[#allocation5 + $0x8] sm:$0xff] %v369
    %444 = vst [vmem:[#allocation5 + $0x10] sm:$0xff] %v438
    %445 = vst [vmem:[#allocation5 + $0x18] sm:$0xff] %v440
    // Predicated region
    $region18: #{tpu_custom_call.1} parent=1 // pred_check
      _
    $region19: #{tpu_custom_call.1} parent=1 // pred_check_branch
      %447 = sbr.rel (0) target = $region21
    $region20: #{tpu_custom_call.1} parent=1 // pred_region
      %s449 = ssub.s32 512, 512
      %450 = vsyncadd [#allocation4], %s449
      %s452 = sshll.u32 [#allocation5], 4
      %s453 = int_to_ptr.vmem [resolvable:$true] %s452
      %455 = dma.vmem_to_hbm [thread:$0]  %s453, 512, %s3, [#allocation4]
    $region21: #{tpu_custom_call.1} parent=1 // pred_fallthru
      _
    // Predicated region
    $region22: #{tpu_custom_call.1} parent=1 // pred_check
      _
    $region23: #{tpu_custom_call.1} parent=1 // pred_check_branch
      %457 = sbr.rel (0) target = $region25
    $region24: #{tpu_custom_call.1} parent=1 // pred_region
      %458 = dma.done [#allocation4], 512
    $region25: #{tpu_custom_call.1} parent=1 // pred_fallthru
      _
    %459 = vsyncpa [#allocation3], 1
    %460 = vsyncpa [#allocation4], 1

</llo_original>
